<compile_context>
chip_gen: v7x
topology: tpu7x:2x2x1
jax: 0.10.0
libtpu: 0.0.40
codegen_flags: <defaults>
</compile_context>

<pallas_src>
import functools

import numpy as np
import jax
import jax.numpy as jnp
from jax import lax
from jax.experimental import pallas as pl
from jax.experimental.pallas import tpu as pltpu

# ----------------------------------------------------------------------------
# Deterministic "parameters" of the pipeline (synthetic init, no checkpoint).
# ----------------------------------------------------------------------------
GAIN = 1.2
GAMMA = 2.2
NOISE_STD = 0.01
KSIZE = 5
SIGMA = 1.0
PAD = KSIZE // 2


def _gauss1d(ksize: int, sigma: float) -> np.ndarray:
    ax = np.arange(ksize, dtype=np.float64) - (ksize - 1) / 2.0
    g = np.exp(-0.5 * (ax / sigma) ** 2)
    return (g / g.sum()).astype(np.float32)


_G1 = _gauss1d(KSIZE, SIGMA)  # separable 1-D Gaussian taps (symmetric), baked in


def _i32(x: int) -> int:
    """Python int -> two's-complement int32 value (for hash constants)."""
    x &= 0xFFFFFFFF
    return x - (1 << 32) if x >= (1 << 31) else x


_HASH_M1 = _i32(0x7FEB352D)
_HASH_M2 = _i32(0x846CA68B)
_SEED_MUL = _i32(0x9E3779B1)
_STREAM2 = _i32(0x68BC21EB)


# ----------------------------------------------------------------------------
# Pallas kernel: CB packed plane-groups per grid step.
# ----------------------------------------------------------------------------
def _mix32(x):
    """xorshift-multiply integer mixer (int32, wraps).  Pure VPU ops."""
    x = x ^ (x >> 16)
    x = x * jnp.int32(_HASH_M1)
    x = x ^ (x >> 13)
    x = x * jnp.int32(_HASH_M2)
    x = x ^ (x >> 16)
    return x


def _degrade_kernel(seed_ref, x_ref, o_ref, *, H, W, Wp, CB, noise_std):
    # seed_ref : SMEM (1,) int32      scalar-prefetched RNG seed
    # x_ref    : VMEM (CB, H, Wp)     Wp = k*W lane-packed planes
    # o_ref    : VMEM (CB, H, Wp)
    kv = [float(v) for v in _G1]               # horizontal taps
    kvg = [float(v) * GAIN for v in _G1]       # vertical taps with GAIN folded in

    packed = Wp != W
    x = x_ref[...]

    # Hoisted iotas (reused by blur masks and the noise counter).
    row = lax.broadcasted_iota(jnp.int32, (CB, H, Wp), 1)
    col = lax.broadcasted_iota(jnp.int32, (CB, H, Wp), 2)
    # Packing only allowed for power-of-two W, so (col % W) == (col & (W-1)).
    col_mod = (col & jnp.int32(W - 1)) if packed else col

    # --- 1)+2a) gain + vertical blur: sublane rolls with zero-row masks -----
    vb = jnp.float32(kvg[PAD]) * x
    for d in (1, 2):
        dn = pltpu.roll(x, shift=d, axis=1)        # contributes x[h - d]
        up = pltpu.roll(x, shift=H - d, axis=1)    # contributes x[h + d]
        tap = (jnp.where(row >= d, dn, 0.0) +
               jnp.where(row < H - d, up, 0.0))
        vb = vb + jnp.float32(kvg[PAD - d]) * tap  # symmetric taps

    # --- 2b) horizontal blur: lane rolls with per-plane zero-pad masks ------
    acc = jnp.float32(kv[PAD]) * vb
    for d in (1, 2):
        rt = pltpu.roll(vb, shift=d, axis=2)       # contributes x[w - d]
        lt = pltpu.roll(vb, shift=Wp - d, axis=2)  # contributes x[w + d]
        tap = (jnp.where(col_mod >= d, rt, 0.0) +
               jnp.where(col_mod < W - d, lt, 0.0))
        acc = acc + jnp.float32(kv[PAD - d]) * tap

    # --- 3) additive Gaussian read noise, counter-hash generated on-chip ----
    if noise_std > 0.0:  # static branch
        plane = lax.broadcasted_iota(jnp.int32, (CB, H, Wp), 0)
        flat = (pl.program_id(0) * jnp.int32(_i32(CB * H * Wp))
                + plane * jnp.int32(_i32(H * Wp))
                + row * jnp.int32(Wp) + col)
        seed_term = seed_ref[0] * jnp.int32(_SEED_MUL)   # decorrelates adjacent seeds
        h1 = _mix32(flat + seed_term)
        h2 = _mix32(flat + seed_term + jnp.int32(_STREAM2))
        # 4 x 16-bit uniforms -> Irwin-Hall(4) ~ N(0, 1):
        #   u_i = (v_i + 0.5)/65536, z = (sum(u_i) - 2) * sqrt(3)
        s = ((h1 & 0xFFFF) + ((h1 >> 16) & 0xFFFF) +
             (h2 & 0xFFFF) + ((h2 >> 16) & 0xFFFF))
        z = (s.astype(jnp.float32) - jnp.float32(131070.0)) * \
            jnp.float32(np.sqrt(3.0) / 65536.0)
        acc = acc + jnp.float32(noise_std) * z

    # --- saturate, 4) gamma compression, 5) 8-bit quantize + final clip -----
    y = jnp.clip(acc, 0.0, 1.0)
    # y ** (1/gamma) via EUP exp/log.  y == 0 maps to ~3.6e-6, which quantizes
    # to 0, so no explicit zero-select is needed.
    y = jnp.exp(jnp.log(jnp.maximum(y, jnp.float32(1e-12))) * jnp.float32(1.0 / GAMMA))
    y = jnp.round(y * jnp.float32(255.0)) * jnp.float32(1.0 / 255.0)
    o_ref[...] = jnp.clip(y, 0.0, 1.0).astype(o_ref.dtype)


# ----------------------------------------------------------------------------
# Wrapper helpers
# ----------------------------------------------------------------------------
def _tpu_vmem_and_cores():
    """(physical VMEM bytes per core, has_two_tensorcores)."""
    cap = 64 * 1024 * 1024            # conservative default (v7x per-TC VMEM)
    try:
        cap = int(pltpu.get_tpu_info().vmem_capacity_bytes)
    except Exception:
        pass
    two_cores = False
    try:
        two_cores = "7x" in jax.devices()[0].device_kind.lower()   # v7x: 2 TCs/chip
    except Exception:
        pass
    return cap, two_cores


def _groups_per_block(G, H, Wp, vmem_cap, two_cores):
    """Plane-groups per grid step: fit VMEM budget, divide G exactly."""
    budget = int(vmem_cap * 0.65)
    per_group = 4 * (4 * H * Wp)      # f32: 2x in + 2x out double-buffered blocks
    cb = max(1, min(G, budget // max(per_group, 1)))
    while G % cb:
        cb -= 1
    # Only split for parallelism when the chip actually has 2 TensorCores.
    if two_cores and G >= 2 and G // cb < 2:
        cb = max(1, G // 2)
        while G % cb:
            cb -= 1
    return cb


def image_degradation_pipeline(image: jax.Array, seed: int = 0,
                               noise_std: float = NOISE_STD) -> jax.Array:
    """image: (N, C, H, W) float32. Returns degraded image, same shape."""
    image = image.astype(jnp.float32)
    N, C, H, W = image.shape
    NC = N * C
    x = image.reshape(NC, H, W)                  # free (collapses leading dims)

    # Lane-dense packing: put k planes side-by-side along the lane axis.
    k = 1
    if W < 128 and (W & (W - 1)) == 0:           # power-of-two W: col % W == col & (W-1)
        k = max(1, 128 // W)
        while NC % k:
            k -= 1
    # TODO(synk): lane-pack non-power-of-two W (needs an in-kernel col//W trick).
    G = NC // k
    Wp = W * k
    xp = (x.reshape(G, k, H, W).transpose(0, 2, 1, 3).reshape(G, H, Wp)
          if k > 1 else x)

    cap, two_cores = _tpu_vmem_and_cores()
    CB = _groups_per_block(G, H, Wp, cap, two_cores)
    grid = (G // CB,)
    vmem_limit = min(int(cap), max(32 * 1024 * 1024, int(cap * 0.80)))

    kernel = functools.partial(_degrade_kernel, H=H, W=W, Wp=Wp, CB=CB,
                               noise_std=float(noise_std))
    seeds = jnp.full((1,), seed, dtype=jnp.int32)

    out = pl.pallas_call(
        kernel,
        out_shape=jax.ShapeDtypeStruct((G, H, Wp), jnp.float32),
        grid_spec=pltpu.PrefetchScalarGridSpec(
            num_scalar_prefetch=1,
            grid=grid,
            in_specs=[pl.BlockSpec((CB, H, Wp), lambda p, s: (p, 0, 0))],
            out_specs=pl.BlockSpec((CB, H, Wp), lambda p, s: (p, 0, 0)),
        ),
        compiler_params=pltpu.CompilerParams(
            dimension_semantics=("parallel",),
            vmem_limit_bytes=vmem_limit,
        ),
    )(seeds, xp)

    if k > 1:
        out = out.reshape(G, H, k, W).transpose(0, 2, 1, 3).reshape(NC, H, W)
    return out.reshape(N, C, H, W)


# ----------------------------------------------------------------------------
# Pure-JAX reference (noise-free path) for the sanity check
# ----------------------------------------------------------------------------
def _reference(image):
    H, W = image.shape[-2:]
    x = image * GAIN
    xp = jnp.pad(x, ((0, 0), (0, 0), (PAD, PAD), (PAD, PAD)))
    k2 = np.outer(_G1, _G1)
    acc = jnp.zeros_like(x)
    for i in range(KSIZE):
        for j in range(KSIZE):
            acc = acc + float(k2[i, j]) * xp[..., i:i + H, j:j + W]
    y = jnp.clip(acc, 0.0, 1.0)
    y = jnp.power(y, 1.0 / GAMMA)
    y = jnp.round(y * 255.0) / 255.0
    return jnp.clip(y, 0.0, 1.0)


if __name__ == "__main__":
    key = jax.random.PRNGKey(0)
    N, C, H, W = 2, 4, 16, 16
    image = jax.random.uniform(key, (N, C, H, W), dtype=jnp.float32)

    # Correctness: with noise disabled the kernel must match the pure-JAX
    # reference; float-association differences are absorbed by the 8-bit
    # quantizer except exactly at rounding boundaries (hence 1-LSB tolerance).
    clean = jax.block_until_ready(
        image_degradation_pipeline(image, seed=0, noise_std=0.0))
    ref = jax.block_until_ready(_reference(image))
    np.testing.assert_allclose(np.asarray(clean), np.asarray(ref),
                               atol=1.01 / 255.0, rtol=0.0)

    # Full pipeline with on-chip Gaussian-approximate noise (module semantics;
    # not bit-identical to a torch RNG, so sanity-checked statistically).
    noisy = jax.block_until_ready(
        image_degradation_pipeline(image, seed=123, noise_std=NOISE_STD))
    a = np.asarray(noisy)
    c = np.asarray(clean)
    assert a.min() >= 0.0 and a.max() <= 1.0
    assert float(np.mean(np.abs(a - c))) < 0.05       # noise is small
    assert float(np.max(np.abs(a - c))) > 0.0         # ...but actually present

    print("KERNEL_OK")
</pallas_src>

<mosaic_0001>
module attributes {stable_mosaic.version = 11 : i64} {
  func.func @_degrade_kernel(%arg0: i32, %arg1: memref<1xi32, #tpu.memory_space<smem>>, %arg2: memref<1x16x128xf32, #tpu.memory_space<vmem>>, %arg3: memref<1x16x128xf32, #tpu.memory_space<vmem>>) attributes {dimension_semantics = [#tpu.dimension_semantics<parallel>], iteration_bounds = array<i64: 1>, scalar_prefetch = 1 : i64, scratch_operands = 0 : i64, tpu.core_type = #tpu.core_type<tc>, window_params = [{transform_indices = @transform_0, window_bounds = array<i64: 1, 16, 128>}, {transform_indices = @transform_1, window_bounds = array<i64: 1, 16, 128>}]} {
    %c0 = arith.constant 0 : index
    %c0_0 = arith.constant 0 : index
    %c0_1 = arith.constant 0 : index
    %0 = vector.load %arg2[%c0, %c0_0, %c0_1] : memref<1x16x128xf32, #tpu.memory_space<vmem>>, vector<1x16x128xf32>
    %1 = tpu.iota {dimensions = array<i32: 1>} : vector<1x16x128xi32>
    %2 = tpu.iota {dimensions = array<i32: 2>} : vector<1x16x128xi32>
    %c15_i32 = arith.constant 15 : i32
    %3 = vector.broadcast %c15_i32 : i32 to vector<1x16x128xi32>
    %4 = arith.andi %2, %3 : vector<1x16x128xi32>
    %cst = arith.constant 0.483143955 : f32
    %5 = vector.broadcast %cst : f32 to vector<1x16x128xf32>
    %6 = arith.mulf %5, %0 : vector<1x16x128xf32>
    %c1_i32 = arith.constant 1 : i32
    %7 = tpu.dynamic_rotate %0 by %c1_i32 dim 1 : vector<1x16x128xf32>, i32 -> vector<1x16x128xf32>
    %c15_i32_2 = arith.constant 15 : i32
    %8 = tpu.dynamic_rotate %0 by %c15_i32_2 dim 1 : vector<1x16x128xf32>, i32 -> vector<1x16x128xf32>
    %c1_i32_3 = arith.constant 1 : i32
    %9 = vector.broadcast %c1_i32_3 : i32 to vector<1x16x128xi32>
    %10 = arith.cmpi sge, %1, %9 : vector<1x16x128xi32>
    %cst_4 = arith.constant 0.000000e+00 : f32
    %11 = vector.broadcast %cst_4 : f32 to vector<1x16x128xf32>
    %12 = arith.select %10, %7, %11 : vector<1x16x128xi1>, vector<1x16x128xf32>
    %c15_i32_5 = arith.constant 15 : i32
    %13 = vector.broadcast %c15_i32_5 : i32 to vector<1x16x128xi32>
    %14 = arith.cmpi slt, %1, %13 : vector<1x16x128xi32>
    %cst_6 = arith.constant 0.000000e+00 : f32
    %15 = vector.broadcast %cst_6 : f32 to vector<1x16x128xf32>
    %16 = arith.select %14, %8, %15 : vector<1x16x128xi1>, vector<1x16x128xf32>
    %17 = arith.addf %12, %16 : vector<1x16x128xf32>
    %cst_7 = arith.constant 0.293041617 : f32
    %18 = vector.broadcast %cst_7 : f32 to vector<1x16x128xf32>
    %19 = arith.mulf %18, %17 : vector<1x16x128xf32>
    %20 = arith.addf %6, %19 : vector<1x16x128xf32>
    %c2_i32 = arith.constant 2 : i32
    %21 = tpu.dynamic_rotate %0 by %c2_i32 dim 1 : vector<1x16x128xf32>, i32 -> vector<1x16x128xf32>
    %c14_i32 = arith.constant 14 : i32
    %22 = tpu.dynamic_rotate %0 by %c14_i32 dim 1 : vector<1x16x128xf32>, i32 -> vector<1x16x128xf32>
    %c2_i32_8 = arith.constant 2 : i32
    %23 = vector.broadcast %c2_i32_8 : i32 to vector<1x16x128xi32>
    %24 = arith.cmpi sge, %1, %23 : vector<1x16x128xi32>
    %cst_9 = arith.constant 0.000000e+00 : f32
    %25 = vector.broadcast %cst_9 : f32 to vector<1x16x128xf32>
    %26 = arith.select %24, %21, %25 : vector<1x16x128xi1>, vector<1x16x128xf32>
    %c14_i32_10 = arith.constant 14 : i32
    %27 = vector.broadcast %c14_i32_10 : i32 to vector<1x16x128xi32>
    %28 = arith.cmpi slt, %1, %27 : vector<1x16x128xi32>
    %cst_11 = arith.constant 0.000000e+00 : f32
    %29 = vector.broadcast %cst_11 : f32 to vector<1x16x128xf32>
    %30 = arith.select %28, %22, %29 : vector<1x16x128xi1>, vector<1x16x128xf32>
    %31 = arith.addf %26, %30 : vector<1x16x128xf32>
    %cst_12 = arith.constant 0.065386422 : f32
    %32 = vector.broadcast %cst_12 : f32 to vector<1x16x128xf32>
    %33 = arith.mulf %32, %31 : vector<1x16x128xf32>
    %34 = arith.addf %20, %33 : vector<1x16x128xf32>
    %cst_13 = arith.constant 0.402619958 : f32
    %35 = vector.broadcast %cst_13 : f32 to vector<1x16x128xf32>
    %36 = arith.mulf %35, %34 : vector<1x16x128xf32>
    %c1_i32_14 = arith.constant 1 : i32
    %37 = tpu.dynamic_rotate %34 by %c1_i32_14 dim 2 : vector<1x16x128xf32>, i32 -> vector<1x16x128xf32>
    %c127_i32 = arith.constant 127 : i32
    %38 = tpu.dynamic_rotate %34 by %c127_i32 dim 2 : vector<1x16x128xf32>, i32 -> vector<1x16x128xf32>
    %c1_i32_15 = arith.constant 1 : i32
    %39 = vector.broadcast %c1_i32_15 : i32 to vector<1x16x128xi32>
    %40 = arith.cmpi sge, %4, %39 : vector<1x16x128xi32>
    %cst_16 = arith.constant 0.000000e+00 : f32
    %41 = vector.broadcast %cst_16 : f32 to vector<1x16x128xf32>
    %42 = arith.select %40, %37, %41 : vector<1x16x128xi1>, vector<1x16x128xf32>
    %c15_i32_17 = arith.constant 15 : i32
    %43 = vector.broadcast %c15_i32_17 : i32 to vector<1x16x128xi32>
    %44 = arith.cmpi slt, %4, %43 : vector<1x16x128xi32>
    %cst_18 = arith.constant 0.000000e+00 : f32
    %45 = vector.broadcast %cst_18 : f32 to vector<1x16x128xf32>
    %46 = arith.select %44, %38, %45 : vector<1x16x128xi1>, vector<1x16x128xf32>
    %47 = arith.addf %42, %46 : vector<1x16x128xf32>
    %cst_19 = arith.constant 0.244201347 : f32
    %48 = vector.broadcast %cst_19 : f32 to vector<1x16x128xf32>
    %49 = arith.mulf %48, %47 : vector<1x16x128xf32>
    %50 = arith.addf %36, %49 : vector<1x16x128xf32>
    %c2_i32_20 = arith.constant 2 : i32
    %51 = tpu.dynamic_rotate %34 by %c2_i32_20 dim 2 : vector<1x16x128xf32>, i32 -> vector<1x16x128xf32>
    %c126_i32 = arith.constant 126 : i32
    %52 = tpu.dynamic_rotate %34 by %c126_i32 dim 2 : vector<1x16x128xf32>, i32 -> vector<1x16x128xf32>
    %c2_i32_21 = arith.constant 2 : i32
    %53 = vector.broadcast %c2_i32_21 : i32 to vector<1x16x128xi32>
    %54 = arith.cmpi sge, %4, %53 : vector<1x16x128xi32>
    %cst_22 = arith.constant 0.000000e+00 : f32
    %55 = vector.broadcast %cst_22 : f32 to vector<1x16x128xf32>
    %56 = arith.select %54, %51, %55 : vector<1x16x128xi1>, vector<1x16x128xf32>
    %c14_i32_23 = arith.constant 14 : i32
    %57 = vector.broadcast %c14_i32_23 : i32 to vector<1x16x128xi32>
    %58 = arith.cmpi slt, %4, %57 : vector<1x16x128xi32>
    %cst_24 = arith.constant 0.000000e+00 : f32
    %59 = vector.broadcast %cst_24 : f32 to vector<1x16x128xf32>
    %60 = arith.select %58, %52, %59 : vector<1x16x128xi1>, vector<1x16x128xf32>
    %61 = arith.addf %56, %60 : vector<1x16x128xf32>
    %cst_25 = arith.constant 0.054488685 : f32
    %62 = vector.broadcast %cst_25 : f32 to vector<1x16x128xf32>
    %63 = arith.mulf %62, %61 : vector<1x16x128xf32>
    %64 = arith.addf %50, %63 : vector<1x16x128xf32>
    %cst_26 = arith.constant 0.000000e+00 : f32
    %cst_27 = arith.constant 1.000000e+00 : f32
    %65 = vector.broadcast %cst_26 : f32 to vector<1x16x128xf32>
    %66 = arith.maximumf %65, %64 : vector<1x16x128xf32>
    %67 = vector.broadcast %cst_27 : f32 to vector<1x16x128xf32>
    %68 = arith.minimumf %67, %66 : vector<1x16x128xf32>
    %cst_28 = arith.constant 9.99999996E-13 : f32
    %69 = vector.broadcast %cst_28 : f32 to vector<1x16x128xf32>
    %70 = arith.maximumf %68, %69 : vector<1x16x128xf32>
    %71 = math.log %70 : vector<1x16x128xf32>
    %cst_29 = arith.constant 0.454545468 : f32
    %72 = vector.broadcast %cst_29 : f32 to vector<1x16x128xf32>
    %73 = arith.mulf %71, %72 : vector<1x16x128xf32>
    %74 = math.exp %73 : vector<1x16x128xf32>
    %cst_30 = arith.constant 2.550000e+02 : f32
    %75 = vector.broadcast %cst_30 : f32 to vector<1x16x128xf32>
    %76 = arith.mulf %74, %75 : vector<1x16x128xf32>
    %77 = math.roundeven %76 : vector<1x16x128xf32>
    %cst_31 = arith.constant 0.00392156886 : f32
    %78 = vector.broadcast %cst_31 : f32 to vector<1x16x128xf32>
    %79 = arith.mulf %77, %78 : vector<1x16x128xf32>
    %cst_32 = arith.constant 0.000000e+00 : f32
    %cst_33 = arith.constant 1.000000e+00 : f32
    %80 = vector.broadcast %cst_32 : f32 to vector<1x16x128xf32>
    %81 = arith.maximumf %80, %79 : vector<1x16x128xf32>
    %82 = vector.broadcast %cst_33 : f32 to vector<1x16x128xf32>
    %83 = arith.minimumf %82, %81 : vector<1x16x128xf32>
    %c0_34 = arith.constant 0 : index
    %c0_35 = arith.constant 0 : index
    %c0_36 = arith.constant 0 : index
    %84 = vector.load %arg3[%c0_34, %c0_35, %c0_36] : memref<1x16x128xf32, #tpu.memory_space<vmem>>, vector<1x16x128xf32>
    tpu.vector_store %arg3[%c0_34, %c0_35, %c0_36], %83 {strides = array<i32>} : memref<1x16x128xf32, #tpu.memory_space<vmem>>, vector<1x16x128xf32>,
    return
  }
  func.func @transform_0(%arg0: i32, %arg1: memref<1xi32, #tpu.memory_space<smem>>) -> (i32, i32, i32) {
    %c0_i32 = arith.constant 0 : i32
    %c0_i32_0 = arith.constant 0 : i32
    %c0_i32_1 = arith.constant 0 : i32
    return %arg0, %c0_i32, %c0_i32_0 : i32, i32, i32
  }
  func.func @transform_1(%arg0: i32, %arg1: memref<1xi32, #tpu.memory_space<smem>>) -> (i32, i32, i32) {
    %c0_i32 = arith.constant 0 : i32
    %c0_i32_0 = arith.constant 0 : i32
    %c0_i32_1 = arith.constant 0 : i32
    return %arg0, %c0_i32, %c0_i32_0 : i32, i32, i32
  }
}

</mosaic_0001>

<llo_original>
// kernel: tpu_custom_call.1
$region0: #{tpu_custom_call.1}
  #allocation0 [shape = 'u32[]', space=smem, size = 0x4, offset = 0x4, fixed_abs, tag = 'smem constant byte address 0x4 - core index']
  #allocation1 [shape = 'u32[144,128]{1,0:T(1,128)}', space=vmem, size = 0x12000, scoped, tag = 'internal scratch']
  #allocation2 [shape = 's32[1]{0}', space=sflag, size = 0x4, scoped, tag = 'scoped memory for tpu_custom_call.1']
  #allocation3 [shape = 's32[1]{0:T(128)S(6)}', space=smem, size = 0x200, scoped, tag = 'prefetched SMEM operand 0']
  %s0 = inlined_call_operand.<no memory space> [shape: s32[1], index: 0, kind: input, shape index: {}]
  %s1 = inlined_call_operand.hbm [shape: f32[1,16,128], index: 1, kind: input, shape index: {}]
  %s2 = inlined_call_operand.hbm [shape: f32[1,16,128], index: 2, kind: output, shape index: {}]
  %s3 = sld [smem:[#allocation0]]
  $region18: #{tpu_custom_call.1} parent=0
    _
  %s5 = ssub.s32 1, %s3
  %s6 = scalar_select 0, %s5, %s3
  %7 = sst [smem:[#allocation3]] %s0
  $region1: #{tpu_custom_call.1} parent=0
    #allocation4 [shape = 'u8[8192]{0}', space=vmem, size = 0x2000, scoped, tag = 'input window, operand 1, single buffered']
    #allocation5 [shape = 's32[1]{0}', space=sflag, size = 0x4, scoped, tag = 'scoped memory for tpu_custom_call.1']
    #allocation6 [shape = 's32[1]{0}', space=sflag, size = 0x4, scoped, tag = 'scoped memory for tpu_custom_call.1']
    #allocation7 [shape = 'u8[8192]{0}', space=vmem, size = 0x2000, scoped, tag = 'output window, operand 0, single buffered']
    %8 = vsyncpa [#allocation5], 0
    %9 = vsyncpa [#allocation6], 0
    // Predicated region
    $region2: #{tpu_custom_call.1} parent=1 // pred_check
      _
    $region3: #{tpu_custom_call.1} parent=1 // pred_check_branch
      %11 = sbr.rel (0) target = $region5
    $region4: #{tpu_custom_call.1} parent=1 // pred_region
      %s13 = ssub.s32 256, 256
      %14 = vsyncadd [#allocation5], %s13
      %s15 = sshll.u32 [#allocation4], 4
      %s16 = int_to_ptr.vmem [resolvable:$true] %s15
      %21 = dma.hbm_to_vmem [thread:$0]  %s1, 256, %s16, [#allocation5], 128, 128, 8
    $region5: #{tpu_custom_call.1} parent=1 // pred_fallthru
      _
    // Predicated region
    $region6: #{tpu_custom_call.1} parent=1 // pred_check
      _
    $region7: #{tpu_custom_call.1} parent=1 // pred_check_branch
      %23 = sbr.rel (0) target = $region9
    $region8: #{tpu_custom_call.1} parent=1 // pred_region
      %24 = dma.done [#allocation5], 256
    $region9: #{tpu_custom_call.1} parent=1 // pred_fallthru
      _
    %v25 = vld [vmem:[#allocation4] sm:$0xff]
    %v26 = vld [vmem:[#allocation4 + $0x8] sm:$0xff]
    %v27 = vlaneseq
    %v28 = vshrl.u32 %v27, 7
    %v29 = vadd.s32 %v28, 8
    %v30 = vlaneseq
    %v31 = vand.u32 %v30, 127
    %v32 = vand.u32 %v31, 15
    %v33 = vmul.f32 %v25, 0.48314396
    %v34 = vmul.f32 %v26, 0.48314396
    %v35 = vrot.slane %v25, 7
    %v36 = vrot.slane %v26, 7
    %vm37 = vcmp.lt.s32.totalorder %v28, 1
    %v38 = vsel %vm37, %v35, %v36
    %v39 = vsel %vm37, %v36, %v35
    %v40 = vrot.slane %v25, 1
    %v41 = vrot.slane %v26, 1
    %vm42 = vcmp.lt.s32.totalorder %v28, 7
    %v43 = vsel %vm42, %v40, %v41
    %v44 = vsel %vm42, %v41, %v40
    %vm45 = vcmp.ge.s32.totalorder %v28, 1
    %vm46 = vcmp.ge.s32.totalorder %v29, 1
    %v47 = vsel %vm45, %v39, 0.0
    %v48 = vsel %vm46, %v38, 0.0
    %vm49 = vcmp.lt.s32.totalorder %v28, 15
    %vm50 = vcmp.lt.s32.totalorder %v29, 15
    %v51 = vsel %vm49, %v43, 0.0
    %v52 = vsel %vm50, %v44, 0.0
    %v53 = vadd.f32 %v47, %v51
    %v54 = vadd.f32 %v48, %v52
    %v55 = vmul.f32 %v53, 0.29304162
    %v56 = vmul.f32 %v54, 0.29304162
    %v57 = vadd.f32 %v33, %v55
    %v58 = vadd.f32 %v34, %v56
    %v59 = vrot.slane %v25, 6
    %v60 = vrot.slane %v26, 6
    %vm61 = vcmp.lt.s32.totalorder %v28, 2
    %v62 = vsel %vm61, %v59, %v60
    %v63 = vsel %vm61, %v60, %v59
    %v64 = vrot.slane %v25, 2
    %v65 = vrot.slane %v26, 2
    %vm66 = vcmp.lt.s32.totalorder %v28, 6
    %v67 = vsel %vm66, %v64, %v65
    %v68 = vsel %vm66, %v65, %v64
    %vm69 = vcmp.ge.s32.totalorder %v28, 2
    %vm70 = vcmp.ge.s32.totalorder %v29, 2
    %v71 = vsel %vm69, %v63, 0.0
    %v72 = vsel %vm70, %v62, 0.0
    %vm73 = vcmp.lt.s32.totalorder %v28, 14
    %vm74 = vcmp.lt.s32.totalorder %v29, 14
    %v75 = vsel %vm73, %v67, 0.0
    %v76 = vsel %vm74, %v68, 0.0
    %v77 = vadd.f32 %v71, %v75
    %v78 = vadd.f32 %v72, %v76
    %v79 = vmul.f32 %v77, 0.06538642
    %v80 = vmul.f32 %v78, 0.06538642
    %v81 = vadd.f32 %v57, %v79
    %v82 = vadd.f32 %v58, %v80
    %v83 = vmul.f32 %v81, 0.40261996
    %v84 = vmul.f32 %v82, 0.40261996
    %85 = vrot.lane.b32.xlu0 %v81, 1
    %v86 = vpop.permute.xlu0 %85
    %87 = vrot.lane.b32.xlu0 %v82, 1
    %v88 = vpop.permute.xlu0 %87
    %89 = vrot.lane.b32.xlu0 %v81, 127
    %v90 = vpop.permute.xlu0 %89
    %91 = vrot.lane.b32.xlu0 %v82, 127
    %v92 = vpop.permute.xlu0 %91
    %vm93 = vcmp.ge.s32.totalorder %v32, 1
    %v94 = vsel %vm93, %v86, 0.0
    %v95 = vsel %vm93, %v88, 0.0
    %vm96 = vcmp.lt.s32.totalorder %v32, 15
    %v97 = vsel %vm96, %v90, 0.0
    %v98 = vsel %vm96, %v92, 0.0
    %v99 = vadd.f32 %v94, %v97
    %v100 = vadd.f32 %v95, %v98
    %v101 = vmul.f32 %v99, 0.24420135
    %v102 = vmul.f32 %v100, 0.24420135
    %v103 = vadd.f32 %v83, %v101
    %v104 = vadd.f32 %v84, %v102
    %105 = vrot.lane.b32.xlu0 %v81, 2
    %v106 = vpop.permute.xlu0 %105
    %107 = vrot.lane.b32.xlu0 %v82, 2
    %v108 = vpop.permute.xlu0 %107
    %109 = vrot.lane.b32.xlu0 %v81, 126
    %v110 = vpop.permute.xlu0 %109
    %111 = vrot.lane.b32.xlu0 %v82, 126
    %v112 = vpop.permute.xlu0 %111
    %vm113 = vcmp.ge.s32.totalorder %v32, 2
    %v114 = vsel %vm113, %v106, 0.0
    %v115 = vsel %vm113, %v108, 0.0
    %vm116 = vcmp.lt.s32.totalorder %v32, 14
    %v117 = vsel %vm116, %v110, 0.0
    %v118 = vsel %vm116, %v112, 0.0
    %v119 = vadd.f32 %v114, %v117
    %v120 = vadd.f32 %v115, %v118
    %v121 = vmul.f32 %v119, 0.054488685
    %v122 = vmul.f32 %v120, 0.054488685
    %v123 = vadd.f32 %v103, %v121
    %v124 = vadd.f32 %v104, %v122
    %v125 = vmax.f32 %v123, 0.0
    %v126 = vmax.f32 %v124, 0.0
    %v127 = vmin.f32 %v125, 1.0
    %v128 = vmin.f32 %v126, 1.0
    %v129 = vmax.f32 %v127, 1e-12
    %v130 = vmax.f32 %v128, 1e-12
    %v131 = vlog2.pop %v129
    %v132 = vmul.f32 %v131, 0.6931472
    %v133 = vlog2.pop %v130
    %v134 = vmul.f32 %v133, 0.6931472
    %v135 = vmul.f32 %v132, 0.45454547
    %v136 = vmul.f32 %v134, 0.45454547
    %v137 = vmul.f32 %v135, 1.442695
    %v138 = vpow.pop %v137
    %v139 = vmul.f32 %v136, 1.442695
    %v140 = vpow.pop %v139
    %v141 = vmul.f32 %v138, 255.0
    %v142 = vmul.f32 %v140, 255.0
    %v143 = vround.ne.pseudo %v141
    %v144 = vround.ne.pseudo %v142
    %v145 = vmul.f32 %v143, 0.003921569
    %v146 = vmul.f32 %v144, 0.003921569
    %v147 = vmax.f32 %v145, 0.0
    %v148 = vmax.f32 %v146, 0.0
    %v149 = vmin.f32 %v147, 1.0
    %v150 = vmin.f32 %v148, 1.0
    %151 = vst [vmem:[#allocation7] sm:$0xff] %v149
    %152 = vst [vmem:[#allocation7 + $0x8] sm:$0xff] %v150
    // Predicated region
    $region10: #{tpu_custom_call.1} parent=1 // pred_check
      _
    $region11: #{tpu_custom_call.1} parent=1 // pred_check_branch
      %154 = sbr.rel (0) target = $region13
    $region12: #{tpu_custom_call.1} parent=1 // pred_region
      %s156 = ssub.s32 256, 256
      %157 = vsyncadd [#allocation6], %s156
      %s158 = sshll.u32 [#allocation7], 4
      %s159 = int_to_ptr.vmem [resolvable:$true] %s158
      %164 = dma.vmem_to_hbm [thread:$0]  %s159, 256, %s2, [#allocation6], 128, 128, 8
    $region13: #{tpu_custom_call.1} parent=1 // pred_fallthru
      _
    // Predicated region
    $region14: #{tpu_custom_call.1} parent=1 // pred_check
      _
    $region15: #{tpu_custom_call.1} parent=1 // pred_check_branch
      %166 = sbr.rel (0) target = $region17
    $region16: #{tpu_custom_call.1} parent=1 // pred_region
      %167 = dma.done [#allocation6], 256
    $region17: #{tpu_custom_call.1} parent=1 // pred_fallthru
      _
    %168 = vsyncpa [#allocation5], 1
    %169 = vsyncpa [#allocation6], 1

</llo_original>
